<compile_context>
chip_gen: v7x
topology: tpu7x:2x2x1
jax: 0.10.0
libtpu: 0.0.40
codegen_flags: <defaults>
</compile_context>

<pallas_src>
import math

import jax
import jax.numpy as jnp
from jax.experimental import pallas as pl
from jax.experimental.pallas import tpu as pltpu


def _decoder_kernel(w_ref, vec_ref, out_ref, h_ref):
    """GRU recurrence (state in vregs) + hoisted fused-MLP + batched softmax.

    w_ref:   (3, H, W) with W = max(4H, O)
             slot 0: gate RHS for t == 0  (x_0 == 0): [W_hr | W_hz | 0    | W_hn]
             slot 1: gate RHS for t >= 1 (x_t == h_t): [W_ir+W_hr | W_iz+W_hz | W_in | W_hn]
             slot 2: fused MLP weight, (H, O) in cols [:O], zero-padded.
    vec_ref: (1, 5H + O) = [h0 (H) | b_gate (4H) | b_mlp (O)]
    out_ref: (T, O) softmax probabilities.
    h_ref:   (T, H) VMEM scratch holding the stacked hidden states.
    """
    H = w_ref.shape[1]
    T, O = out_ref.shape
    G = 4 * H

    # Hoisted one-time loads (VMEM -> vregs once, reused every step).
    w_g0 = w_ref[0][:, :G]        # (H, 4H)
    w_g1 = w_ref[1][:, :G]        # (H, 4H)
    w_mlp = w_ref[2][:, :O]       # (H, O)
    h = vec_ref[:, :H]            # (1, H) recurrence carry, lives in vregs
    b_g = vec_ref[:, H:H + G]     # (1, 4H) = [b_ir+b_hr | b_iz+b_hz | b_in | b_hn]
    b_mlp = vec_ref[:, H + G:]    # (1, O)

    # T is small (8) -> static unroll keeps the serial chain visible to the
    # LLO scheduler.  Only the GRU update is on the critical path now.
    # TODO(synk): for large T (>~64) switch to lax.fori_loop(..., unroll=4..8).
    for t in range(T):
        g = jnp.dot(h, w_g0 if t == 0 else w_g1,
                    preferred_element_type=jnp.float32) + b_g      # (1, 4H)
        rz = jax.nn.sigmoid(g[:, :2 * H])                          # [r | z]
        r = rz[:, :H]
        z = rz[:, H:]
        n = jnp.tanh(g[:, 2 * H:3 * H] + r * g[:, 3 * H:])
        h = (1.0 - z) * n + z * h          # new hidden == GRU output zs
        # Stash h_t; this store is off the serial recurrence chain.
        h_ref[pl.ds(t, 1), :] = h

    # Hoisted epilogue: one (T,H)@(H,O) dot + one batched softmax.
    h_all = h_ref[...]                                              # (T, H)
    hs = jnp.dot(h_all, w_mlp, preferred_element_type=jnp.float32) + b_mlp
    m = jnp.max(hs, axis=-1, keepdims=True)
    e = jnp.exp(hs - m)
    inv = pl.reciprocal(jnp.sum(e, axis=-1, keepdims=True), approx=True)
    # Single coalesced store of all T rows.
    out_ref[...] = e * inv


def init_params(key, hidden_dim, output_dim):
    """Deterministic PyTorch-like init (uniform(-1/sqrt(H), 1/sqrt(H)))."""
    H, O = hidden_dim, output_dim
    bound = 1.0 / math.sqrt(H)
    ks = jax.random.split(key, 14)
    u = lambda k, shape: jax.random.uniform(
        k, shape, jnp.float32, minval=-bound, maxval=bound)
    return dict(
        # GRU weights in PyTorch layout: (3H, H) and (3H,), gate order [r, z, n]
        w_ih=u(ks[0], (3 * H, H)), w_hh=u(ks[1], (3 * H, H)),
        b_ih=u(ks[2], (3 * H,)), b_hh=u(ks[3], (3 * H,)),
        # Linear layers in PyTorch layout: (out, in) and (out,)
        w1=u(ks[4], (H, H)), b1=u(ks[5], (H,)),
        w2=u(ks[6], (H, H)), b2=u(ks[7], (H,)),
        w3=u(ks[8], (H, H)), b3=u(ks[9], (H,)),
        w4=u(ks[10], (H, H)), b4=u(ks[11], (H,)),
        w5=u(ks[12], (O, H)), b5=u(ks[13], (O,)),
    )


def _prepare_inputs(hidden, params):
    """Offline algebraic restructuring into two lane-dense kernel inputs."""
    H = hidden.shape[2]
    p = params
    O = p['w5'].shape[0]
    h0 = hidden.reshape(1, H).astype(jnp.float32)

    Wih = p['w_ih'].T          # (H, 3H), column blocks [r | z | n]
    Whh = p['w_hh'].T          # (H, 3H)

    # t >= 1: x_t == h_t, so the r/z gates only need (W_ih + W_hh); the n gate
    # keeps its input/hidden halves separate (r multiplies only the hidden half).
    w_g1 = jnp.concatenate(
        [Wih[:, :2 * H] + Whh[:, :2 * H], Wih[:, 2 * H:], Whh[:, 2 * H:]], axis=1)
    # t == 0: x_0 == 0, so the input-side matmul contributions vanish.
    w_g0 = jnp.concatenate(
        [Whh[:, :2 * H], jnp.zeros((H, H), jnp.float32), Whh[:, 2 * H:]], axis=1)

    # 5 chained activation-free Linears compose into one affine map (offline).
    w_mlp = p['w1'].T @ p['w2'].T @ p['w3'].T @ p['w4'].T @ p['w5'].T   # (H, O)
    b = p['b1'] @ p['w2'].T + p['b2']
    b = b @ p['w3'].T + p['b3']
    b = b @ p['w4'].T + p['b4']
    b_mlp = b @ p['w5'].T + p['b5']                                     # (O,)

    # One weight slab (3, H, W) and one vector slab (1, 5H + O).
    W = max(4 * H, O)
    pad_cols = lambda x: jnp.pad(x, ((0, 0), (0, W - x.shape[1])))
    w_all = jnp.stack([pad_cols(w_g0), pad_cols(w_g1), pad_cols(w_mlp)], axis=0)

    b_g = jnp.concatenate(
        [p['b_ih'][:2 * H] + p['b_hh'][:2 * H], p['b_ih'][2 * H:], p['b_hh'][2 * H:]])
    vecs = jnp.concatenate([h0[0], b_g, b_mlp]).reshape(1, 5 * H + O)

    return w_all.astype(jnp.float32), vecs.astype(jnp.float32)


@jax.jit
def neural_ode_decoder_forward(hidden, target, params):
    """hidden: (1, 1, H) fp32; target: (T, 1, O) (only its shape is used).

    Returns (T, 1, O) fp32, matching the PyTorch module.  Note: because the
    softmax uses an EUP approximate reciprocal, rows sum to 1 only to ~1e-4.
    """
    T, _, O = target.shape
    H = hidden.shape[2]
    w_all, vecs = _prepare_inputs(hidden, params)

    out2d = pl.pallas_call(
        _decoder_kernel,
        out_shape=jax.ShapeDtypeStruct((T, O), jnp.float32),
        in_specs=[pl.BlockSpec(memory_space=pltpu.MemorySpace.VMEM),
                  pl.BlockSpec(memory_space=pltpu.MemorySpace.VMEM)],
        out_specs=pl.BlockSpec(memory_space=pltpu.MemorySpace.VMEM),
        scratch_shapes=[pltpu.VMEM((T, H), jnp.float32)],
        # Footprint is trivial at H=32/O=16.  If H scales to 512-1024 (esp. on
        # v7x's 64 MiB VMEM), keep the weight slab in HBM (pl.ANY) with a
        # one-shot DMA and set pltpu.CompilerParams(vmem_limit_bytes=...).
    )(w_all, vecs)

    return out2d.reshape(T, 1, O)


def reference_forward(hidden, target, p):
    """Pure-JAX reference of the PyTorch forward (unfused, exact softmax)."""
    T, _, O = target.shape
    H = hidden.shape[2]
    x = jnp.zeros((1, H), jnp.float32)
    h = hidden.reshape(1, H).astype(jnp.float32)
    outs = []
    for _ in range(T):
        gi = x @ p['w_ih'].T + p['b_ih']
        gh = h @ p['w_hh'].T + p['b_hh']
        r = jax.nn.sigmoid(gi[:, :H] + gh[:, :H])
        z = jax.nn.sigmoid(gi[:, H:2 * H] + gh[:, H:2 * H])
        n = jnp.tanh(gi[:, 2 * H:] + r * gh[:, 2 * H:])
        h = (1.0 - z) * n + z * h
        x = h
        y = x @ p['w1'].T + p['b1']
        y = y @ p['w2'].T + p['b2']
        y = y @ p['w3'].T + p['b3']
        y = y @ p['w4'].T + p['b4']
        hs = y @ p['w5'].T + p['b5']
        outs.append(jax.nn.softmax(hs, axis=-1))
    return jnp.stack(outs, axis=0).reshape(T, 1, O)


if __name__ == "__main__":
    key = jax.random.PRNGKey(0)
    hidden_dim, output_dim, T = 32, 16, 8

    params = init_params(key, hidden_dim, output_dim)
    kh, kt = jax.random.split(jax.random.fold_in(key, 1))
    hidden = jax.random.normal(kh, (1, 1, hidden_dim), jnp.float32)
    target = jax.random.normal(kt, (T, 1, output_dim), jnp.float32)

    out = neural_ode_decoder_forward(hidden, target, params)
    out = jax.block_until_ready(out)

    ref = reference_forward(hidden, target, params)
    assert out.shape == (T, 1, output_dim), out.shape
    # Tolerance covers: offline MLP composition and gate-weight summing
    # (~1e-6) plus the EUP approximate reciprocal in the softmax (~1e-4 abs).
    max_err = float(jnp.max(jnp.abs(out - ref)))
    assert max_err < 1e-3, f"mismatch vs reference: {max_err}"

    print("KERNEL_OK")
</pallas_src>

<mosaic_0001>
module attributes {stable_mosaic.version = 11 : i64} {
  func.func @_decoder_kernel(%arg0: memref<3x32x128xf32, #tpu.memory_space<vmem>>, %arg1: memref<1x176xf32, #tpu.memory_space<vmem>>, %arg2: memref<8x16xf32, #tpu.memory_space<vmem>>, %arg3: memref<8x32xf32, #tpu.memory_space<vmem>>) attributes {dimension_semantics = [], scalar_prefetch = 0 : i64, scratch_operands = 1 : i64, tpu.core_type = #tpu.core_type<tc>} {
    %c0 = arith.constant 0 : index
    %c0_0 = arith.constant 0 : index
    %c0_1 = arith.constant 0 : index
    %0 = vector.load %arg0[%c0, %c0_0, %c0_1] : memref<3x32x128xf32, #tpu.memory_space<vmem>>, vector<1x32x128xf32>
    %1 = vector.shape_cast %0 : vector<1x32x128xf32> to vector<32x128xf32>
    %c1 = arith.constant 1 : index
    %c0_2 = arith.constant 0 : index
    %c0_3 = arith.constant 0 : index
    %2 = vector.load %arg0[%c1, %c0_2, %c0_3] : memref<3x32x128xf32, #tpu.memory_space<vmem>>, vector<1x32x128xf32>
    %3 = vector.shape_cast %2 : vector<1x32x128xf32> to vector<32x128xf32>
    %c2 = arith.constant 2 : index
    %c0_4 = arith.constant 0 : index
    %c0_5 = arith.constant 0 : index
    %4 = vector.load %arg0[%c2, %c0_4, %c0_5] : memref<3x32x128xf32, #tpu.memory_space<vmem>>, vector<1x32x128xf32>
    %5 = vector.shape_cast %4 : vector<1x32x128xf32> to vector<32x128xf32>
    %6 = vector.extract_strided_slice %5 {offsets = [0, 0], sizes = [32, 16], strides = [1, 1]} : vector<32x128xf32> to vector<32x16xf32>
    %c0_6 = arith.constant 0 : index
    %c0_7 = arith.constant 0 : index
    %7 = vector.load %arg1[%c0_6, %c0_7] : memref<1x176xf32, #tpu.memory_space<vmem>>, vector<1x32xf32>
    %c0_8 = arith.constant 0 : index
    %c32 = arith.constant 32 : index
    %8 = vector.load %arg1[%c0_8, %c32] : memref<1x176xf32, #tpu.memory_space<vmem>>, vector<1x128xf32>
    %c0_9 = arith.constant 0 : index
    %c160 = arith.constant 160 : index
    %9 = vector.load %arg1[%c0_9, %c160] : memref<1x176xf32, #tpu.memory_space<vmem>>, vector<1x16xf32>
    %cst = arith.constant dense<0.000000e+00> : vector<1x128xf32>
    %10 = tpu.matmul %7, %1, %cst {dimension_numbers = #tpu.dot_dimension_numbers<[1], [0], [0], [1], [0, 0, 1, 1], [], []>} : vector<1x32xf32>, vector<32x128xf32>, vector<1x128xf32> -> vector<1x128xf32>
    %11 = arith.addf %10, %8 : vector<1x128xf32>
    %12 = vector.extract_strided_slice %11 {offsets = [0, 0], sizes = [1, 64], strides = [1, 1]} : vector<1x128xf32> to vector<1x64xf32>
    %13 = arith.negf %12 : vector<1x64xf32>
    %14 = math.exp %13 : vector<1x64xf32>
    %cst_10 = arith.constant 1.000000e+00 : f32
    %15 = vector.broadcast %cst_10 : f32 to vector<1x64xf32>
    %16 = arith.addf %15, %14 : vector<1x64xf32>
    %17 = arith.divf %15, %16 : vector<1x64xf32>
    %18 = vector.extract_strided_slice %17 {offsets = [0, 0], sizes = [1, 32], strides = [1, 1]} : vector<1x64xf32> to vector<1x32xf32>
    %19 = vector.extract_strided_slice %17 {offsets = [0, 32], sizes = [1, 32], strides = [1, 1]} : vector<1x64xf32> to vector<1x32xf32>
    %20 = vector.extract_strided_slice %11 {offsets = [0, 64], sizes = [1, 32], strides = [1, 1]} : vector<1x128xf32> to vector<1x32xf32>
    %21 = vector.extract_strided_slice %11 {offsets = [0, 96], sizes = [1, 32], strides = [1, 1]} : vector<1x128xf32> to vector<1x32xf32>
    %22 = arith.mulf %18, %21 : vector<1x32xf32>
    %23 = arith.addf %20, %22 : vector<1x32xf32>
    %24 = math.tanh %23 : vector<1x32xf32>
    %cst_11 = arith.constant 1.000000e+00 : f32
    %25 = vector.broadcast %cst_11 : f32 to vector<1x32xf32>
    %26 = arith.subf %25, %19 : vector<1x32xf32>
    %27 = arith.mulf %26, %24 : vector<1x32xf32>
    %28 = arith.mulf %19, %7 : vector<1x32xf32>
    %29 = arith.addf %27, %28 : vector<1x32xf32>
    %c0_12 = arith.constant 0 : index
    %c0_13 = arith.constant 0 : index
    %30 = vector.load %arg3[%c0_12, %c0_13] : memref<8x32xf32, #tpu.memory_space<vmem>>, vector<1x32xf32>
    tpu.vector_store %arg3[%c0_12, %c0_13], %29 {strides = array<i32>} : memref<8x32xf32, #tpu.memory_space<vmem>>, vector<1x32xf32>,
    %cst_14 = arith.constant dense<0.000000e+00> : vector<1x128xf32>
    %31 = tpu.matmul %29, %3, %cst_14 {dimension_numbers = #tpu.dot_dimension_numbers<[1], [0], [0], [1], [0, 0, 1, 1], [], []>} : vector<1x32xf32>, vector<32x128xf32>, vector<1x128xf32> -> vector<1x128xf32>
    %32 = arith.addf %31, %8 : vector<1x128xf32>
    %33 = vector.extract_strided_slice %32 {offsets = [0, 0], sizes = [1, 64], strides = [1, 1]} : vector<1x128xf32> to vector<1x64xf32>
    %34 = arith.negf %33 : vector<1x64xf32>
    %35 = math.exp %34 : vector<1x64xf32>
    %cst_15 = arith.constant 1.000000e+00 : f32
    %36 = vector.broadcast %cst_15 : f32 to vector<1x64xf32>
    %37 = arith.addf %36, %35 : vector<1x64xf32>
    %38 = arith.divf %36, %37 : vector<1x64xf32>
    %39 = vector.extract_strided_slice %38 {offsets = [0, 0], sizes = [1, 32], strides = [1, 1]} : vector<1x64xf32> to vector<1x32xf32>
    %40 = vector.extract_strided_slice %38 {offsets = [0, 32], sizes = [1, 32], strides = [1, 1]} : vector<1x64xf32> to vector<1x32xf32>
    %41 = vector.extract_strided_slice %32 {offsets = [0, 64], sizes = [1, 32], strides = [1, 1]} : vector<1x128xf32> to vector<1x32xf32>
    %42 = vector.extract_strided_slice %32 {offsets = [0, 96], sizes = [1, 32], strides = [1, 1]} : vector<1x128xf32> to vector<1x32xf32>
    %43 = arith.mulf %39, %42 : vector<1x32xf32>
    %44 = arith.addf %41, %43 : vector<1x32xf32>
    %45 = math.tanh %44 : vector<1x32xf32>
    %cst_16 = arith.constant 1.000000e+00 : f32
    %46 = vector.broadcast %cst_16 : f32 to vector<1x32xf32>
    %47 = arith.subf %46, %40 : vector<1x32xf32>
    %48 = arith.mulf %47, %45 : vector<1x32xf32>
    %49 = arith.mulf %40, %29 : vector<1x32xf32>
    %50 = arith.addf %48, %49 : vector<1x32xf32>
    %c1_17 = arith.constant 1 : index
    %c0_18 = arith.constant 0 : index
    %51 = vector.load %arg3[%c1_17, %c0_18] : memref<8x32xf32, #tpu.memory_space<vmem>>, vector<1x32xf32>
    tpu.vector_store %arg3[%c1_17, %c0_18], %50 {strides = array<i32>} : memref<8x32xf32, #tpu.memory_space<vmem>>, vector<1x32xf32>,
    %cst_19 = arith.constant dense<0.000000e+00> : vector<1x128xf32>
    %52 = tpu.matmul %50, %3, %cst_19 {dimension_numbers = #tpu.dot_dimension_numbers<[1], [0], [0], [1], [0, 0, 1, 1], [], []>} : vector<1x32xf32>, vector<32x128xf32>, vector<1x128xf32> -> vector<1x128xf32>
    %53 = arith.addf %52, %8 : vector<1x128xf32>
    %54 = vector.extract_strided_slice %53 {offsets = [0, 0], sizes = [1, 64], strides = [1, 1]} : vector<1x128xf32> to vector<1x64xf32>
    %55 = arith.negf %54 : vector<1x64xf32>
    %56 = math.exp %55 : vector<1x64xf32>
    %cst_20 = arith.constant 1.000000e+00 : f32
    %57 = vector.broadcast %cst_20 : f32 to vector<1x64xf32>
    %58 = arith.addf %57, %56 : vector<1x64xf32>
    %59 = arith.divf %57, %58 : vector<1x64xf32>
    %60 = vector.extract_strided_slice %59 {offsets = [0, 0], sizes = [1, 32], strides = [1, 1]} : vector<1x64xf32> to vector<1x32xf32>
    %61 = vector.extract_strided_slice %59 {offsets = [0, 32], sizes = [1, 32], strides = [1, 1]} : vector<1x64xf32> to vector<1x32xf32>
    %62 = vector.extract_strided_slice %53 {offsets = [0, 64], sizes = [1, 32], strides = [1, 1]} : vector<1x128xf32> to vector<1x32xf32>
    %63 = vector.extract_strided_slice %53 {offsets = [0, 96], sizes = [1, 32], strides = [1, 1]} : vector<1x128xf32> to vector<1x32xf32>
    %64 = arith.mulf %60, %63 : vector<1x32xf32>
    %65 = arith.addf %62, %64 : vector<1x32xf32>
    %66 = math.tanh %65 : vector<1x32xf32>
    %cst_21 = arith.constant 1.000000e+00 : f32
    %67 = vector.broadcast %cst_21 : f32 to vector<1x32xf32>
    %68 = arith.subf %67, %61 : vector<1x32xf32>
    %69 = arith.mulf %68, %66 : vector<1x32xf32>
    %70 = arith.mulf %61, %50 : vector<1x32xf32>
    %71 = arith.addf %69, %70 : vector<1x32xf32>
    %c2_22 = arith.constant 2 : index
    %c0_23 = arith.constant 0 : index
    %72 = vector.load %arg3[%c2_22, %c0_23] : memref<8x32xf32, #tpu.memory_space<vmem>>, vector<1x32xf32>
    tpu.vector_store %arg3[%c2_22, %c0_23], %71 {strides = array<i32>} : memref<8x32xf32, #tpu.memory_space<vmem>>, vector<1x32xf32>,
    %cst_24 = arith.constant dense<0.000000e+00> : vector<1x128xf32>
    %73 = tpu.matmul %71, %3, %cst_24 {dimension_numbers = #tpu.dot_dimension_numbers<[1], [0], [0], [1], [0, 0, 1, 1], [], []>} : vector<1x32xf32>, vector<32x128xf32>, vector<1x128xf32> -> vector<1x128xf32>
    %74 = arith.addf %73, %8 : vector<1x128xf32>
    %75 = vector.extract_strided_slice %74 {offsets = [0, 0], sizes = [1, 64], strides = [1, 1]} : vector<1x128xf32> to vector<1x64xf32>
    %76 = arith.negf %75 : vector<1x64xf32>
    %77 = math.exp %76 : vector<1x64xf32>
    %cst_25 = arith.constant 1.000000e+00 : f32
    %78 = vector.broadcast %cst_25 : f32 to vector<1x64xf32>
    %79 = arith.addf %78, %77 : vector<1x64xf32>
    %80 = arith.divf %78, %79 : vector<1x64xf32>
    %81 = vector.extract_strided_slice %80 {offsets = [0, 0], sizes = [1, 32], strides = [1, 1]} : vector<1x64xf32> to vector<1x32xf32>
    %82 = vector.extract_strided_slice %80 {offsets = [0, 32], sizes = [1, 32], strides = [1, 1]} : vector<1x64xf32> to vector<1x32xf32>
    %83 = vector.extract_strided_slice %74 {offsets = [0, 64], sizes = [1, 32], strides = [1, 1]} : vector<1x128xf32> to vector<1x32xf32>
    %84 = vector.extract_strided_slice %74 {offsets = [0, 96], sizes = [1, 32], strides = [1, 1]} : vector<1x128xf32> to vector<1x32xf32>
    %85 = arith.mulf %81, %84 : vector<1x32xf32>
    %86 = arith.addf %83, %85 : vector<1x32xf32>
    %87 = math.tanh %86 : vector<1x32xf32>
    %cst_26 = arith.constant 1.000000e+00 : f32
    %88 = vector.broadcast %cst_26 : f32 to vector<1x32xf32>
    %89 = arith.subf %88, %82 : vector<1x32xf32>
    %90 = arith.mulf %89, %87 : vector<1x32xf32>
    %91 = arith.mulf %82, %71 : vector<1x32xf32>
    %92 = arith.addf %90, %91 : vector<1x32xf32>
    %c3 = arith.constant 3 : index
    %c0_27 = arith.constant 0 : index
    %93 = vector.load %arg3[%c3, %c0_27] : memref<8x32xf32, #tpu.memory_space<vmem>>, vector<1x32xf32>
    tpu.vector_store %arg3[%c3, %c0_27], %92 {strides = array<i32>} : memref<8x32xf32, #tpu.memory_space<vmem>>, vector<1x32xf32>,
    %cst_28 = arith.constant dense<0.000000e+00> : vector<1x128xf32>
    %94 = tpu.matmul %92, %3, %cst_28 {dimension_numbers = #tpu.dot_dimension_numbers<[1], [0], [0], [1], [0, 0, 1, 1], [], []>} : vector<1x32xf32>, vector<32x128xf32>, vector<1x128xf32> -> vector<1x128xf32>
    %95 = arith.addf %94, %8 : vector<1x128xf32>
    %96 = vector.extract_strided_slice %95 {offsets = [0, 0], sizes = [1, 64], strides = [1, 1]} : vector<1x128xf32> to vector<1x64xf32>
    %97 = arith.negf %96 : vector<1x64xf32>
    %98 = math.exp %97 : vector<1x64xf32>
    %cst_29 = arith.constant 1.000000e+00 : f32
    %99 = vector.broadcast %cst_29 : f32 to vector<1x64xf32>
    %100 = arith.addf %99, %98 : vector<1x64xf32>
    %101 = arith.divf %99, %100 : vector<1x64xf32>
    %102 = vector.extract_strided_slice %101 {offsets = [0, 0], sizes = [1, 32], strides = [1, 1]} : vector<1x64xf32> to vector<1x32xf32>
    %103 = vector.extract_strided_slice %101 {offsets = [0, 32], sizes = [1, 32], strides = [1, 1]} : vector<1x64xf32> to vector<1x32xf32>
    %104 = vector.extract_strided_slice %95 {offsets = [0, 64], sizes = [1, 32], strides = [1, 1]} : vector<1x128xf32> to vector<1x32xf32>
    %105 = vector.extract_strided_slice %95 {offsets = [0, 96], sizes = [1, 32], strides = [1, 1]} : vector<1x128xf32> to vector<1x32xf32>
    %106 = arith.mulf %102, %105 : vector<1x32xf32>
    %107 = arith.addf %104, %106 : vector<1x32xf32>
    %108 = math.tanh %107 : vector<1x32xf32>
    %cst_30 = arith.constant 1.000000e+00 : f32
    %109 = vector.broadcast %cst_30 : f32 to vector<1x32xf32>
    %110 = arith.subf %109, %103 : vector<1x32xf32>
    %111 = arith.mulf %110, %108 : vector<1x32xf32>
    %112 = arith.mulf %103, %92 : vector<1x32xf32>
    %113 = arith.addf %111, %112 : vector<1x32xf32>
    %c4 = arith.constant 4 : index
    %c0_31 = arith.constant 0 : index
    %114 = vector.load %arg3[%c4, %c0_31] : memref<8x32xf32, #tpu.memory_space<vmem>>, vector<1x32xf32>
    tpu.vector_store %arg3[%c4, %c0_31], %113 {strides = array<i32>} : memref<8x32xf32, #tpu.memory_space<vmem>>, vector<1x32xf32>,
    %cst_32 = arith.constant dense<0.000000e+00> : vector<1x128xf32>
    %115 = tpu.matmul %113, %3, %cst_32 {dimension_numbers = #tpu.dot_dimension_numbers<[1], [0], [0], [1], [0, 0, 1, 1], [], []>} : vector<1x32xf32>, vector<32x128xf32>, vector<1x128xf32> -> vector<1x128xf32>
    %116 = arith.addf %115, %8 : vector<1x128xf32>
    %117 = vector.extract_strided_slice %116 {offsets = [0, 0], sizes = [1, 64], strides = [1, 1]} : vector<1x128xf32> to vector<1x64xf32>
    %118 = arith.negf %117 : vector<1x64xf32>
    %119 = math.exp %118 : vector<1x64xf32>
    %cst_33 = arith.constant 1.000000e+00 : f32
    %120 = vector.broadcast %cst_33 : f32 to vector<1x64xf32>
    %121 = arith.addf %120, %119 : vector<1x64xf32>
    %122 = arith.divf %120, %121 : vector<1x64xf32>
    %123 = vector.extract_strided_slice %122 {offsets = [0, 0], sizes = [1, 32], strides = [1, 1]} : vector<1x64xf32> to vector<1x32xf32>
    %124 = vector.extract_strided_slice %122 {offsets = [0, 32], sizes = [1, 32], strides = [1, 1]} : vector<1x64xf32> to vector<1x32xf32>
    %125 = vector.extract_strided_slice %116 {offsets = [0, 64], sizes = [1, 32], strides = [1, 1]} : vector<1x128xf32> to vector<1x32xf32>
    %126 = vector.extract_strided_slice %116 {offsets = [0, 96], sizes = [1, 32], strides = [1, 1]} : vector<1x128xf32> to vector<1x32xf32>
    %127 = arith.mulf %123, %126 : vector<1x32xf32>
    %128 = arith.addf %125, %127 : vector<1x32xf32>
    %129 = math.tanh %128 : vector<1x32xf32>
    %cst_34 = arith.constant 1.000000e+00 : f32
    %130 = vector.broadcast %cst_34 : f32 to vector<1x32xf32>
    %131 = arith.subf %130, %124 : vector<1x32xf32>
    %132 = arith.mulf %131, %129 : vector<1x32xf32>
    %133 = arith.mulf %124, %113 : vector<1x32xf32>
    %134 = arith.addf %132, %133 : vector<1x32xf32>
    %c5 = arith.constant 5 : index
    %c0_35 = arith.constant 0 : index
    %135 = vector.load %arg3[%c5, %c0_35] : memref<8x32xf32, #tpu.memory_space<vmem>>, vector<1x32xf32>
    tpu.vector_store %arg3[%c5, %c0_35], %134 {strides = array<i32>} : memref<8x32xf32, #tpu.memory_space<vmem>>, vector<1x32xf32>,
    %cst_36 = arith.constant dense<0.000000e+00> : vector<1x128xf32>
    %136 = tpu.matmul %134, %3, %cst_36 {dimension_numbers = #tpu.dot_dimension_numbers<[1], [0], [0], [1], [0, 0, 1, 1], [], []>} : vector<1x32xf32>, vector<32x128xf32>, vector<1x128xf32> -> vector<1x128xf32>
    %137 = arith.addf %136, %8 : vector<1x128xf32>
    %138 = vector.extract_strided_slice %137 {offsets = [0, 0], sizes = [1, 64], strides = [1, 1]} : vector<1x128xf32> to vector<1x64xf32>
    %139 = arith.negf %138 : vector<1x64xf32>
    %140 = math.exp %139 : vector<1x64xf32>
    %cst_37 = arith.constant 1.000000e+00 : f32
    %141 = vector.broadcast %cst_37 : f32 to vector<1x64xf32>
    %142 = arith.addf %141, %140 : vector<1x64xf32>
    %143 = arith.divf %141, %142 : vector<1x64xf32>
    %144 = vector.extract_strided_slice %143 {offsets = [0, 0], sizes = [1, 32], strides = [1, 1]} : vector<1x64xf32> to vector<1x32xf32>
    %145 = vector.extract_strided_slice %143 {offsets = [0, 32], sizes = [1, 32], strides = [1, 1]} : vector<1x64xf32> to vector<1x32xf32>
    %146 = vector.extract_strided_slice %137 {offsets = [0, 64], sizes = [1, 32], strides = [1, 1]} : vector<1x128xf32> to vector<1x32xf32>
    %147 = vector.extract_strided_slice %137 {offsets = [0, 96], sizes = [1, 32], strides = [1, 1]} : vector<1x128xf32> to vector<1x32xf32>
    %148 = arith.mulf %144, %147 : vector<1x32xf32>
    %149 = arith.addf %146, %148 : vector<1x32xf32>
    %150 = math.tanh %149 : vector<1x32xf32>
    %cst_38 = arith.constant 1.000000e+00 : f32
    %151 = vector.broadcast %cst_38 : f32 to vector<1x32xf32>
    %152 = arith.subf %151, %145 : vector<1x32xf32>
    %153 = arith.mulf %152, %150 : vector<1x32xf32>
    %154 = arith.mulf %145, %134 : vector<1x32xf32>
    %155 = arith.addf %153, %154 : vector<1x32xf32>
    %c6 = arith.constant 6 : index
    %c0_39 = arith.constant 0 : index
    %156 = vector.load %arg3[%c6, %c0_39] : memref<8x32xf32, #tpu.memory_space<vmem>>, vector<1x32xf32>
    tpu.vector_store %arg3[%c6, %c0_39], %155 {strides = array<i32>} : memref<8x32xf32, #tpu.memory_space<vmem>>, vector<1x32xf32>,
    %cst_40 = arith.constant dense<0.000000e+00> : vector<1x128xf32>
    %157 = tpu.matmul %155, %3, %cst_40 {dimension_numbers = #tpu.dot_dimension_numbers<[1], [0], [0], [1], [0, 0, 1, 1], [], []>} : vector<1x32xf32>, vector<32x128xf32>, vector<1x128xf32> -> vector<1x128xf32>
    %158 = arith.addf %157, %8 : vector<1x128xf32>
    %159 = vector.extract_strided_slice %158 {offsets = [0, 0], sizes = [1, 64], strides = [1, 1]} : vector<1x128xf32> to vector<1x64xf32>
    %160 = arith.negf %159 : vector<1x64xf32>
    %161 = math.exp %160 : vector<1x64xf32>
    %cst_41 = arith.constant 1.000000e+00 : f32
    %162 = vector.broadcast %cst_41 : f32 to vector<1x64xf32>
    %163 = arith.addf %162, %161 : vector<1x64xf32>
    %164 = arith.divf %162, %163 : vector<1x64xf32>
    %165 = vector.extract_strided_slice %164 {offsets = [0, 0], sizes = [1, 32], strides = [1, 1]} : vector<1x64xf32> to vector<1x32xf32>
    %166 = vector.extract_strided_slice %164 {offsets = [0, 32], sizes = [1, 32], strides = [1, 1]} : vector<1x64xf32> to vector<1x32xf32>
    %167 = vector.extract_strided_slice %158 {offsets = [0, 64], sizes = [1, 32], strides = [1, 1]} : vector<1x128xf32> to vector<1x32xf32>
    %168 = vector.extract_strided_slice %158 {offsets = [0, 96], sizes = [1, 32], strides = [1, 1]} : vector<1x128xf32> to vector<1x32xf32>
    %169 = arith.mulf %165, %168 : vector<1x32xf32>
    %170 = arith.addf %167, %169 : vector<1x32xf32>
    %171 = math.tanh %170 : vector<1x32xf32>
    %cst_42 = arith.constant 1.000000e+00 : f32
    %172 = vector.broadcast %cst_42 : f32 to vector<1x32xf32>
    %173 = arith.subf %172, %166 : vector<1x32xf32>
    %174 = arith.mulf %173, %171 : vector<1x32xf32>
    %175 = arith.mulf %166, %155 : vector<1x32xf32>
    %176 = arith.addf %174, %175 : vector<1x32xf32>
    %c7 = arith.constant 7 : index
    %c0_43 = arith.constant 0 : index
    %177 = vector.load %arg3[%c7, %c0_43] : memref<8x32xf32, #tpu.memory_space<vmem>>, vector<1x32xf32>
    tpu.vector_store %arg3[%c7, %c0_43], %176 {strides = array<i32>} : memref<8x32xf32, #tpu.memory_space<vmem>>, vector<1x32xf32>,
    %c0_44 = arith.constant 0 : index
    %c0_45 = arith.constant 0 : index
    %178 = vector.load %arg3[%c0_44, %c0_45] : memref<8x32xf32, #tpu.memory_space<vmem>>, vector<8x32xf32>
    %cst_46 = arith.constant dense<0.000000e+00> : vector<8x16xf32>
    %179 = tpu.matmul %178, %6, %cst_46 {dimension_numbers = #tpu.dot_dimension_numbers<[1], [0], [0], [1], [0, 0, 1, 1], [], []>} : vector<8x32xf32>, vector<32x16xf32>, vector<8x16xf32> -> vector<8x16xf32>
    %180 = vector.broadcast %9 : vector<1x16xf32> to vector<8x16xf32>
    %181 = arith.addf %179, %180 : vector<8x16xf32>
    %cst_47 = arith.constant dense<0xFF800000> : vector<8xf32>
    %182 = vector.multi_reduction <maximumf>, %181, %cst_47 [1] : vector<8x16xf32> to vector<8xf32>
    %183 = vector.shape_cast %182 : vector<8xf32> to vector<8x1xf32>
    %184 = vector.broadcast %183 : vector<8x1xf32> to vector<8x16xf32>
    %185 = arith.subf %181, %184 : vector<8x16xf32>
    %186 = math.exp %185 : vector<8x16xf32>
    %cst_48 = arith.constant dense<0.000000e+00> : vector<8xf32>
    %187 = vector.multi_reduction <add>, %186, %cst_48 [1] : vector<8x16xf32> to vector<8xf32>
    %188 = vector.shape_cast %187 : vector<8xf32> to vector<8x1xf32>
    %189 = tpu.reciprocal %188 {approx = true} : vector<8x1xf32> -> vector<8x1xf32>
    %190 = vector.broadcast %189 : vector<8x1xf32> to vector<8x16xf32>
    %191 = arith.mulf %186, %190 : vector<8x16xf32>
    %c0_49 = arith.constant 0 : index
    %c0_50 = arith.constant 0 : index
    %192 = vector.load %arg2[%c0_49, %c0_50] : memref<8x16xf32, #tpu.memory_space<vmem>>, vector<8x16xf32>
    tpu.vector_store %arg2[%c0_49, %c0_50], %191 {strides = array<i32>} : memref<8x16xf32, #tpu.memory_space<vmem>>, vector<8x16xf32>,
    return
  }
}

</mosaic_0001>

<llo_original>
// kernel: neural_ode_decoder_forward.1
$region0: #{neural_ode_decoder_forward.1}
  #allocation0 [shape = 'u32[]', space=smem, size = 0x4, offset = 0x4, fixed_abs, tag = 'smem constant byte address 0x4 - core index']
  #allocation1 [shape = 'u32[144,128]{1,0:T(1,128)}', space=vmem, size = 0x12000, scoped, tag = 'internal scratch']
  #allocation2 [shape = 'f32[8,32]{1,0:T(8,128)}', space=vmem, size = 0x1000, scoped, tag = 'scratch operand']
  %s0 = inlined_call_operand.vmem [shape: f32[3,32,128], index: 0, kind: input, shape index: {}]
  %s1 = inlined_call_operand.vmem [shape: f32[1,176], index: 1, kind: input, shape index: {}]
  %s2 = inlined_call_operand.hbm [shape: f32[8,16], index: 2, kind: output, shape index: {}]
  %s3 = sld [smem:[#allocation0]]
  $region18: #{neural_ode_decoder_forward.1} parent=0
    _
  %s5 = ssub.s32 1, %s3
  %s6 = scalar_select 0, %s5, %s3
  $region1: #{neural_ode_decoder_forward.1} parent=0
    #allocation3 [shape = 'u8[4096]{0}', space=vmem, size = 0x1000, scoped, tag = 'output window, operand 0, single buffered']
    #allocation4 [shape = 's32[1]{0}', space=sflag, size = 0x4, scoped, tag = 'scoped memory for neural_ode_decoder_forward.1']
    %7 = vsyncpa [#allocation4], 0
    // Predicated region
    $region2: #{neural_ode_decoder_forward.1} parent=1 // pred_check
      _
    $region3: #{neural_ode_decoder_forward.1} parent=1 // pred_check_branch
      %9 = sbr.rel (0) target = $region5
    $region4: #{neural_ode_decoder_forward.1} parent=1 // pred_region
      _
    $region5: #{neural_ode_decoder_forward.1} parent=1 // pred_fallthru
      _
    // Predicated region
    $region6: #{neural_ode_decoder_forward.1} parent=1 // pred_check
      _
    $region7: #{neural_ode_decoder_forward.1} parent=1 // pred_check_branch
      %11 = sbr.rel (0) target = $region9
    $region8: #{neural_ode_decoder_forward.1} parent=1 // pred_region
      _
    $region9: #{neural_ode_decoder_forward.1} parent=1 // pred_fallthru
      _
    %v12 = vld [vmem:[%s0] sm:$0xff]
    %v13 = vld [vmem:[%s0 + $0x8] sm:$0xff]
    %v14 = vld [vmem:[%s0 + $0x10] sm:$0xff]
    %v15 = vld [vmem:[%s0 + $0x18] sm:$0xff]
    %s16 = scalar_lea.vmem %s0, 32
    %v17 = vld [vmem:[%s16] sm:$0xff]
    %v18 = vld [vmem:[%s16 + $0x8] sm:$0xff]
    %v19 = vld [vmem:[%s16 + $0x10] sm:$0xff]
    %v20 = vld [vmem:[%s16 + $0x18] sm:$0xff]
    %s21 = scalar_lea.vmem %s0, 64
    %v22 = vld [vmem:[%s21] sm:$0xff]
    %v23 = vld [vmem:[%s21 + $0x8] sm:$0xff]
    %v24 = vld [vmem:[%s21 + $0x10] sm:$0xff]
    %v25 = vld [vmem:[%s21 + $0x18] sm:$0xff]
    %v26 = vld [vmem:[%s1] sm:$0x1]
    %v27 = vld [vmem:[%s1] sm:$0x3]
    %v28 = vld [vmem:[%s1 + $0x1] sm:$0x1]
    %v30 = vlaneseq
    %v31 = vshrl.u32 %v30, 7
    %v32 = vsub.s32 0, %v31
    %v33 = vrot.slane %v27, %v32
    %v34 = vlaneseq
    %v35 = vshrl.u32 %v34, 7
    %v36 = vsub.s32 1, %v35
    %v37 = vrot.slane %v27, %v36
    %38 = vrot.lane.b32.xlu0 %v33, 96
    %v39 = vpop.permute.xlu0 %38
    %40 = vrot.lane.b32.xlu0 %v37, 96
    %v41 = vpop.permute.xlu0 %40
    %vm42 = vcmask 785408
    %v43 = vsel %vm42, %v39, %v41
    %vm45 = vcmask 261120
    %v47 = vsel %vm45, %v26, 0
    %49 = vmatprep.subr.mxu0 0.0
    %50 = vmatpush1.msra.mxu0 %v12
    %51 = vmatprep.subr.mxu0 0.0
    %52 = vmatpush1.msra.mxu0 %v13
    %53 = vmatprep.subr.mxu0 0.0
    %54 = vmatpush1.msra.mxu0 %v14
    %55 = vmatprep.subr.mxu0 0.0
    %56 = vmatpush1.msra.mxu0 %v15
    %57 = vmatprep.subr.mxu0 0.0
    %58 = vmatpush1.msra.mxu0 0.0
    %59 = vmatprep.subr.mxu0 0.0
    %60 = vmatpush1.msra.mxu0 0.0
    %61 = vmatprep.subr.mxu0 0.0
    %62 = vmatpush1.msra.mxu0 0.0
    %63 = vmatprep.subr.mxu0 0.0
    %64 = vmatpush1.msra.mxu0 0.0
    %65 = vmatprep.subr.mxu0 0.0
    %66 = vmatpush1.msra.mxu0 0.0
    %67 = vmatprep.subr.mxu0 0.0
    %68 = vmatpush1.msra.mxu0 0.0
    %69 = vmatprep.subr.mxu0 0.0
    %70 = vmatpush1.msra.mxu0 0.0
    %71 = vmatprep.subr.mxu0 0.0
    %72 = vmatpush1.msra.mxu0 0.0
    %73 = vmatprep.subr.mxu0 0.0
    %74 = vmatpush1.msra.mxu0 0.0
    %75 = vmatprep.subr.mxu0 0.0
    %76 = vmatpush1.msra.mxu0 0.0
    %77 = vmatprep.subr.mxu0 0.0
    %78 = vmatpush1.msra.mxu0 0.0
    %79 = vmatprep.subr.mxu0 0.0
    %80 = vmatpush1.msra.mxu0 0.0
    %81 = vmatprep.subr.mxu0 0.0
    %82 = vmatpush1.msra.mxu0 0.0
    %83 = vmatprep.subr.mxu0 0.0
    %84 = vmatpush1.msra.mxu0 0.0
    %85 = vmatprep.subr.mxu0 0.0
    %86 = vmatpush1.msra.mxu0 0.0
    %87 = vmatprep.subr.mxu0 0.0
    %88 = vmatpush1.msra.mxu0 0.0
    %89 = vmatprep.subr.mxu0 0.0
    %90 = vmatpush1.msra.mxu0 0.0
    %91 = vmatprep.subr.mxu0 0.0
    %92 = vmatpush1.msra.mxu0 0.0
    %93 = vmatprep.subr.mxu0 0.0
    %94 = vmatpush1.msra.mxu0 0.0
    %95 = vmatprep.subr.mxu0 0.0
    %96 = vmatpush1.msra.mxu0 0.0
    %97 = vmatprep.subr.mxu0 0.0
    %98 = vmatpush1.msra.mxu0 0.0
    %99 = vmatprep.subr.mxu0 0.0
    %100 = vmatpush1.msra.mxu0 0.0
    %101 = vmatprep.subr.mxu0 0.0
    %102 = vmatpush1.msra.mxu0 0.0
    %103 = vmatprep.subr.mxu0 0.0
    %104 = vmatpush1.msra.mxu0 0.0
    %105 = vmatprep.subr.mxu0 0.0
    %106 = vmatpush1.msra.mxu0 0.0
    %107 = vmatprep.subr.mxu0 0.0
    %108 = vmatpush1.msra.mxu0 0.0
    %109 = vmatprep.subr.mxu0 0.0
    %110 = vmatpush1.msra.mxu0 0.0
    %111 = vmatprep.subr.mxu0 0.0
    %112 = vmatpush1.msra.mxu0 0.0
    %113 = vmatprep.mubr.f32.mxu0 0.0
    %114 = vmatmul.mubr.f32.gmra.mrb[0].mxu0 %v47
    %v115 = vpop.f32.mrb[0].mxu0
    %v116 = vadd.f32 %v43, %v115
    %v117 = vpop.f32.mrb[0].mxu0
    %118 = vdwg.mxu0
    %v119 = vxor.u32 %v116, 2147483648
    %v120 = vmul.f32 %v119, 1.442695
    %v121 = vpow.pop %v120
    %v122 = vadd.f32 %v121, 1.0
    %v123 = vrcp.pop %v122
    %v124 = vmul.f32 1.0, %v123
    %126 = vrot.lane.b32.xlu0 %v116, 32
    %v127 = vpop.permute.xlu0 %126
    %v129 = vmul.f32 %v124, %v127
    %131 = vrot.lane.b32.xlu0 %v129, 64
    %v132 = vpop.permute.xlu0 %131
    %v134 = vadd.f32 %v116, %v132
    %v135 = vtanh.pop %v134
    %v136 = vsub.f32 1.0, %v124
    %138 = vrot.lane.b32.xlu0 %v135, 96
    %v139 = vpop.permute.xlu0 %138
    %v141 = vmul.f32 %v136, %v139
    %v142 = vlaneseq
    %v143 = vshrl.u32 %v142, 7
    %v144 = vsub.s32 0, %v143
    %v145 = vrot.slane %v26, %v144
    %146 = vrot.lane.b32.xlu0 %v145, 32
    %v147 = vpop.permute.xlu0 %146
    %v149 = vmul.f32 %v124, %v147
    %v150 = vadd.f32 %v141, %v149
    %152 = vrot.lane.b32.xlu0 %v150, 96
    %v153 = vpop.permute.xlu0 %152
    %vm155 = vcmask 253952
    %156 = vst.msk [vmem:[#allocation2] sm:$0x1] %vm155, %v153
    %v157 = vsel %vm45, %v153, 0
    %159 = vmatprep.subr.mxu0 0.0
    %160 = vmatpush1.msra.mxu0 %v17
    %161 = vmatprep.subr.mxu0 0.0
    %162 = vmatpush1.msra.mxu0 %v18
    %163 = vmatprep.subr.mxu0 0.0
    %164 = vmatpush1.msra.mxu0 %v19
    %165 = vmatprep.subr.mxu0 0.0
    %166 = vmatpush1.msra.mxu0 %v20
    %167 = vmatprep.subr.mxu0 0.0
    %168 = vmatpush1.msra.mxu0 0.0
    %169 = vmatprep.subr.mxu0 0.0
    %170 = vmatpush1.msra.mxu0 0.0
    %171 = vmatprep.subr.mxu0 0.0
    %172 = vmatpush1.msra.mxu0 0.0
    %173 = vmatprep.subr.mxu0 0.0
    %174 = vmatpush1.msra.mxu0 0.0
    %175 = vmatprep.subr.mxu0 0.0
    %176 = vmatpush1.msra.mxu0 0.0
    %177 = vmatprep.subr.mxu0 0.0
    %178 = vmatpush1.msra.mxu0 0.0
    %179 = vmatprep.subr.mxu0 0.0
    %180 = vmatpush1.msra.mxu0 0.0
    %181 = vmatprep.subr.mxu0 0.0
    %182 = vmatpush1.msra.mxu0 0.0
    %183 = vmatprep.subr.mxu0 0.0
    %184 = vmatpush1.msra.mxu0 0.0
    %185 = vmatprep.subr.mxu0 0.0
    %186 = vmatpush1.msra.mxu0 0.0
    %187 = vmatprep.subr.mxu0 0.0
    %188 = vmatpush1.msra.mxu0 0.0
    %189 = vmatprep.subr.mxu0 0.0
    %190 = vmatpush1.msra.mxu0 0.0
    %191 = vmatprep.subr.mxu0 0.0
    %192 = vmatpush1.msra.mxu0 0.0
    %193 = vmatprep.subr.mxu0 0.0
    %194 = vmatpush1.msra.mxu0 0.0
    %195 = vmatprep.subr.mxu0 0.0
    %196 = vmatpush1.msra.mxu0 0.0
    %197 = vmatprep.subr.mxu0 0.0
    %198 = vmatpush1.msra.mxu0 0.0
    %199 = vmatprep.subr.mxu0 0.0
    %200 = vmatpush1.msra.mxu0 0.0
    %201 = vmatprep.subr.mxu0 0.0
    %202 = vmatpush1.msra.mxu0 0.0
    %203 = vmatprep.subr.mxu0 0.0
    %204 = vmatpush1.msra.mxu0 0.0
    %205 = vmatprep.subr.mxu0 0.0
    %206 = vmatpush1.msra.mxu0 0.0
    %207 = vmatprep.subr.mxu0 0.0
    %208 = vmatpush1.msra.mxu0 0.0
    %209 = vmatprep.subr.mxu0 0.0
    %210 = vmatpush1.msra.mxu0 0.0
    %211 = vmatprep.subr.mxu0 0.0
    %212 = vmatpush1.msra.mxu0 0.0
    %213 = vmatprep.subr.mxu0 0.0
    %214 = vmatpush1.msra.mxu0 0.0
    %215 = vmatprep.subr.mxu0 0.0
    %216 = vmatpush1.msra.mxu0 0.0
    %217 = vmatprep.subr.mxu0 0.0
    %218 = vmatpush1.msra.mxu0 0.0
    %219 = vmatprep.subr.mxu0 0.0
    %220 = vmatpush1.msra.mxu0 0.0
    %221 = vmatprep.subr.mxu0 0.0
    %222 = vmatpush1.msra.mxu0 0.0
    %223 = vmatprep.mubr.f32.mxu0 0.0
    %224 = vmatmul.mubr.f32.gmra.mrb[0].mxu0 %v157
    %v225 = vpop.f32.mrb[0].mxu0
    %v226 = vadd.f32 %v43, %v225
    %v227 = vpop.f32.mrb[0].mxu0
    %228 = vdwg.mxu0
    %v229 = vxor.u32 %v226, 2147483648
    %v230 = vmul.f32 %v229, 1.442695
    %v231 = vpow.pop %v230
    %v232 = vadd.f32 %v231, 1.0
    %v233 = vrcp.pop %v232
    %v234 = vmul.f32 1.0, %v233
    %236 = vrot.lane.b32.xlu0 %v226, 32
    %v237 = vpop.permute.xlu0 %236
    %v239 = vmul.f32 %v234, %v237
    %241 = vrot.lane.b32.xlu0 %v239, 64
    %v242 = vpop.permute.xlu0 %241
    %v244 = vadd.f32 %v226, %v242
    %v245 = vtanh.pop %v244
    %v246 = vsub.f32 1.0, %v234
    %248 = vrot.lane.b32.xlu0 %v245, 96
    %v249 = vpop.permute.xlu0 %248
    %v251 = vmul.f32 %v246, %v249
    %v252 = vmul.f32 %v234, %v150
    %v253 = vadd.f32 %v251, %v252
    %255 = vrot.lane.b32.xlu0 %v253, 96
    %v256 = vpop.permute.xlu0 %255
    %258 = vst.msk [vmem:[#allocation2 + $0x1] sm:$0x1] %vm155, %v256
    %v259 = vsel %vm45, %v256, 0
    %261 = vmatprep.subr.mxu0 0.0
    %262 = vmatpush1.msra.mxu0 %v17
    %263 = vmatprep.subr.mxu0 0.0
    %264 = vmatpush1.msra.mxu0 %v18
    %265 = vmatprep.subr.mxu0 0.0
    %266 = vmatpush1.msra.mxu0 %v19
    %267 = vmatprep.subr.mxu0 0.0
    %268 = vmatpush1.msra.mxu0 %v20
    %269 = vmatprep.subr.mxu0 0.0
    %270 = vmatpush1.msra.mxu0 0.0
    %271 = vmatprep.subr.mxu0 0.0
    %272 = vmatpush1.msra.mxu0 0.0
    %273 = vmatprep.subr.mxu0 0.0
    %274 = vmatpush1.msra.mxu0 0.0
    %275 = vmatprep.subr.mxu0 0.0
    %276 = vmatpush1.msra.mxu0 0.0
    %277 = vmatprep.subr.mxu0 0.0
    %278 = vmatpush1.msra.mxu0 0.0
    %279 = vmatprep.subr.mxu0 0.0
    %280 = vmatpush1.msra.mxu0 0.0
    %281 = vmatprep.subr.mxu0 0.0
    %282 = vmatpush1.msra.mxu0 0.0
    %283 = vmatprep.subr.mxu0 0.0
    %284 = vmatpush1.msra.mxu0 0.0
    %285 = vmatprep.subr.mxu0 0.0
    %286 = vmatpush1.msra.mxu0 0.0
    %287 = vmatprep.subr.mxu0 0.0
    %288 = vmatpush1.msra.mxu0 0.0
    %289 = vmatprep.subr.mxu0 0.0
    %290 = vmatpush1.msra.mxu0 0.0
    %291 = vmatprep.subr.mxu0 0.0
    %292 = vmatpush1.msra.mxu0 0.0
    %293 = vmatprep.subr.mxu0 0.0
    %294 = vmatpush1.msra.mxu0 0.0
    %295 = vmatprep.subr.mxu0 0.0
    %296 = vmatpush1.msra.mxu0 0.0
    %297 = vmatprep.subr.mxu0 0.0
    %298 = vmatpush1.msra.mxu0 0.0
    %299 = vmatprep.subr.mxu0 0.0
    %300 = vmatpush1.msra.mxu0 0.0
    %301 = vmatprep.subr.mxu0 0.0
    %302 = vmatpush1.msra.mxu0 0.0
    %303 = vmatprep.subr.mxu0 0.0
    %304 = vmatpush1.msra.mxu0 0.0
    %305 = vmatprep.subr.mxu0 0.0
    %306 = vmatpush1.msra.mxu0 0.0
    %307 = vmatprep.subr.mxu0 0.0
    %308 = vmatpush1.msra.mxu0 0.0
    %309 = vmatprep.subr.mxu0 0.0
    %310 = vmatpush1.msra.mxu0 0.0
    %311 = vmatprep.subr.mxu0 0.0
    %312 = vmatpush1.msra.mxu0 0.0
    %313 = vmatprep.subr.mxu0 0.0
    %314 = vmatpush1.msra.mxu0 0.0
    %315 = vmatprep.subr.mxu0 0.0
    %316 = vmatpush1.msra.mxu0 0.0
    %317 = vmatprep.subr.mxu0 0.0
    %318 = vmatpush1.msra.mxu0 0.0
    %319 = vmatprep.subr.mxu0 0.0
    %320 = vmatpush1.msra.mxu0 0.0
    %321 = vmatprep.subr.mxu0 0.0
    %322 = vmatpush1.msra.mxu0 0.0
    %323 = vmatprep.subr.mxu0 0.0
    %324 = vmatpush1.msra.mxu0 0.0
    %325 = vmatprep.mubr.f32.mxu0 0.0
    %326 = vmatmul.mubr.f32.gmra.mrb[0].mxu0 %v259
    %v327 = vpop.f32.mrb[0].mxu0
    %v328 = vadd.f32 %v43, %v327
    %v329 = vpop.f32.mrb[0].mxu0
    %330 = vdwg.mxu0
    %v331 = vxor.u32 %v328, 2147483648
    %v332 = vmul.f32 %v331, 1.442695
    %v333 = vpow.pop %v332
    %v334 = vadd.f32 %v333, 1.0
    %v335 = vrcp.pop %v334
    %v336 = vmul.f32 1.0, %v335
    %338 = vrot.lane.b32.xlu0 %v328, 32
    %v339 = vpop.permute.xlu0 %338
    %v341 = vmul.f32 %v336, %v339
    %343 = vrot.lane.b32.xlu0 %v341, 64
    %v344 = vpop.permute.xlu0 %343
    %v346 = vadd.f32 %v328, %v344
    %v347 = vtanh.pop %v346
    %v348 = vsub.f32 1.0, %v336
    %350 = vrot.lane.b32.xlu0 %v347, 96
    %v351 = vpop.permute.xlu0 %350
    %v353 = vmul.f32 %v348, %v351
    %v354 = vmul.f32 %v336, %v253
    %v355 = vadd.f32 %v353, %v354
    %357 = vrot.lane.b32.xlu0 %v355, 96
    %v358 = vpop.permute.xlu0 %357
    %360 = vst.msk [vmem:[#allocation2 + $0x2] sm:$0x1] %vm155, %v358
    %v361 = vsel %vm45, %v358, 0
    %363 = vmatprep.subr.mxu0 0.0
    %364 = vmatpush1.msra.mxu0 %v17
    %365 = vmatprep.subr.mxu0 0.0
    %366 = vmatpush1.msra.mxu0 %v18
    %367 = vmatprep.subr.mxu0 0.0
    %368 = vmatpush1.msra.mxu0 %v19
    %369 = vmatprep.subr.mxu0 0.0
    %370 = vmatpush1.msra.mxu0 %v20
    %371 = vmatprep.subr.mxu0 0.0
    %372 = vmatpush1.msra.mxu0 0.0
    %373 = vmatprep.subr.mxu0 0.0
    %374 = vmatpush1.msra.mxu0 0.0
    %375 = vmatprep.subr.mxu0 0.0
    %376 = vmatpush1.msra.mxu0 0.0
    %377 = vmatprep.subr.mxu0 0.0
    %378 = vmatpush1.msra.mxu0 0.0
    %379 = vmatprep.subr.mxu0 0.0
    %380 = vmatpush1.msra.mxu0 0.0
    %381 = vmatprep.subr.mxu0 0.0
    %382 = vmatpush1.msra.mxu0 0.0
    %383 = vmatprep.subr.mxu0 0.0
    %384 = vmatpush1.msra.mxu0 0.0
    %385 = vmatprep.subr.mxu0 0.0
    %386 = vmatpush1.msra.mxu0 0.0
    %387 = vmatprep.subr.mxu0 0.0
    %388 = vmatpush1.msra.mxu0 0.0
    %389 = vmatprep.subr.mxu0 0.0
    %390 = vmatpush1.msra.mxu0 0.0
    %391 = vmatprep.subr.mxu0 0.0
    %392 = vmatpush1.msra.mxu0 0.0
    %393 = vmatprep.subr.mxu0 0.0
    %394 = vmatpush1.msra.mxu0 0.0
    %395 = vmatprep.subr.mxu0 0.0
    %396 = vmatpush1.msra.mxu0 0.0
    %397 = vmatprep.subr.mxu0 0.0
    %398 = vmatpush1.msra.mxu0 0.0
    %399 = vmatprep.subr.mxu0 0.0
    %400 = vmatpush1.msra.mxu0 0.0
    %401 = vmatprep.subr.mxu0 0.0
    %402 = vmatpush1.msra.mxu0 0.0
    %403 = vmatprep.subr.mxu0 0.0
    %404 = vmatpush1.msra.mxu0 0.0
    %405 = vmatprep.subr.mxu0 0.0
    %406 = vmatpush1.msra.mxu0 0.0
    %407 = vmatprep.subr.mxu0 0.0
    %408 = vmatpush1.msra.mxu0 0.0
    %409 = vmatprep.subr.mxu0 0.0
    %410 = vmatpush1.msra.mxu0 0.0
    %411 = vmatprep.subr.mxu0 0.0
    %412 = vmatpush1.msra.mxu0 0.0
    %413 = vmatprep.subr.mxu0 0.0
    %414 = vmatpush1.msra.mxu0 0.0
    %415 = vmatprep.subr.mxu0 0.0
    %416 = vmatpush1.msra.mxu0 0.0
    %417 = vmatprep.subr.mxu0 0.0
    %418 = vmatpush1.msra.mxu0 0.0
    %419 = vmatprep.subr.mxu0 0.0
    %420 = vmatpush1.msra.mxu0 0.0
    %421 = vmatprep.subr.mxu0 0.0
    %422 = vmatpush1.msra.mxu0 0.0
    %423 = vmatprep.subr.mxu0 0.0
    %424 = vmatpush1.msra.mxu0 0.0
    %425 = vmatprep.subr.mxu0 0.0
    %426 = vmatpush1.msra.mxu0 0.0
    %427 = vmatprep.mubr.f32.mxu0 0.0
    %428 = vmatmul.mubr.f32.gmra.mrb[0].mxu0 %v361
    %v429 = vpop.f32.mrb[0].mxu0
    %v430 = vadd.f32 %v43, %v429
    %v431 = vpop.f32.mrb[0].mxu0
    %432 = vdwg.mxu0
    %v433 = vxor.u32 %v430, 2147483648
    %v434 = vmul.f32 %v433, 1.442695
    %v435 = vpow.pop %v434
    %v436 = vadd.f32 %v435, 1.0
    %v437 = vrcp.pop %v436
    %v438 = vmul.f32 1.0, %v437
    %440 = vrot.lane.b32.xlu0 %v430, 32
    %v441 = vpop.permute.xlu0 %440
    %v443 = vmul.f32 %v438, %v441
    %445 = vrot.lane.b32.xlu0 %v443, 64
    %v446 = vpop.permute.xlu0 %445
    %v448 = vadd.f32 %v430, %v446
    %v449 = vtanh.pop %v448
    %v450 = vsub.f32 1.0, %v438
    %452 = vrot.lane.b32.xlu0 %v449, 96
    %v453 = vpop.permute.xlu0 %452
    %v455 = vmul.f32 %v450, %v453
    %v456 = vmul.f32 %v438, %v355
    %v457 = vadd.f32 %v455, %v456
    %459 = vrot.lane.b32.xlu0 %v457, 96
    %v460 = vpop.permute.xlu0 %459
    %462 = vst.msk [vmem:[#allocation2 + $0x3] sm:$0x1] %vm155, %v460
    %v463 = vsel %vm45, %v460, 0
    %465 = vmatprep.subr.mxu0 0.0
    %466 = vmatpush1.msra.mxu0 %v17
    %467 = vmatprep.subr.mxu0 0.0
    %468 = vmatpush1.msra.mxu0 %v18
    %469 = vmatprep.subr.mxu0 0.0
    %470 = vmatpush1.msra.mxu0 %v19
    %471 = vmatprep.subr.mxu0 0.0
    %472 = vmatpush1.msra.mxu0 %v20
    %473 = vmatprep.subr.mxu0 0.0
    %474 = vmatpush1.msra.mxu0 0.0
    %475 = vmatprep.subr.mxu0 0.0
    %476 = vmatpush1.msra.mxu0 0.0
    %477 = vmatprep.subr.mxu0 0.0
    %478 = vmatpush1.msra.mxu0 0.0
    %479 = vmatprep.subr.mxu0 0.0
    %480 = vmatpush1.msra.mxu0 0.0
    %481 = vmatprep.subr.mxu0 0.0
    %482 = vmatpush1.msra.mxu0 0.0
    %483 = vmatprep.subr.mxu0 0.0
    %484 = vmatpush1.msra.mxu0 0.0
    %485 = vmatprep.subr.mxu0 0.0
    %486 = vmatpush1.msra.mxu0 0.0
    %487 = vmatprep.subr.mxu0 0.0
    %488 = vmatpush1.msra.mxu0 0.0
    %489 = vmatprep.subr.mxu0 0.0
    %490 = vmatpush1.msra.mxu0 0.0
    %491 = vmatprep.subr.mxu0 0.0
    %492 = vmatpush1.msra.mxu0 0.0
    %493 = vmatprep.subr.mxu0 0.0
    %494 = vmatpush1.msra.mxu0 0.0
    %495 = vmatprep.subr.mxu0 0.0
    %496 = vmatpush1.msra.mxu0 0.0
    %497 = vmatprep.subr.mxu0 0.0
    %498 = vmatpush1.msra.mxu0 0.0
    %499 = vmatprep.subr.mxu0 0.0
    %500 = vmatpush1.msra.mxu0 0.0
    %501 = vmatprep.subr.mxu0 0.0
    %502 = vmatpush1.msra.mxu0 0.0
    %503 = vmatprep.subr.mxu0 0.0
    %504 = vmatpush1.msra.mxu0 0.0
    %505 = vmatprep.subr.mxu0 0.0
    %506 = vmatpush1.msra.mxu0 0.0
    %507 = vmatprep.subr.mxu0 0.0
    %508 = vmatpush1.msra.mxu0 0.0
    %509 = vmatprep.subr.mxu0 0.0
    %510 = vmatpush1.msra.mxu0 0.0
    %511 = vmatprep.subr.mxu0 0.0
    %512 = vmatpush1.msra.mxu0 0.0
    %513 = vmatprep.subr.mxu0 0.0
    %514 = vmatpush1.msra.mxu0 0.0
    %515 = vmatprep.subr.mxu0 0.0
    %516 = vmatpush1.msra.mxu0 0.0
    %517 = vmatprep.subr.mxu0 0.0
    %518 = vmatpush1.msra.mxu0 0.0
    %519 = vmatprep.subr.mxu0 0.0
    %520 = vmatpush1.msra.mxu0 0.0
    %521 = vmatprep.subr.mxu0 0.0
    %522 = vmatpush1.msra.mxu0 0.0
    %523 = vmatprep.subr.mxu0 0.0
    %524 = vmatpush1.msra.mxu0 0.0
    %525 = vmatprep.subr.mxu0 0.0
    %526 = vmatpush1.msra.mxu0 0.0
    %527 = vmatprep.subr.mxu0 0.0
    %528 = vmatpush1.msra.mxu0 0.0
    %529 = vmatprep.mubr.f32.mxu0 0.0
    %530 = vmatmul.mubr.f32.gmra.mrb[0].mxu0 %v463
    %v531 = vpop.f32.mrb[0].mxu0
    %v532 = vadd.f32 %v43, %v531
    %v533 = vpop.f32.mrb[0].mxu0
    %534 = vdwg.mxu0
    %v535 = vxor.u32 %v532, 2147483648
    %v536 = vmul.f32 %v535, 1.442695
    %v537 = vpow.pop %v536
    %v538 = vadd.f32 %v537, 1.0
    %v539 = vrcp.pop %v538
    %v540 = vmul.f32 1.0, %v539
    %542 = vrot.lane.b32.xlu0 %v532, 32
    %v543 = vpop.permute.xlu0 %542
    %v545 = vmul.f32 %v540, %v543
    %547 = vrot.lane.b32.xlu0 %v545, 64
    %v548 = vpop.permute.xlu0 %547
    %v550 = vadd.f32 %v532, %v548
    %v551 = vtanh.pop %v550
    %v552 = vsub.f32 1.0, %v540
    %554 = vrot.lane.b32.xlu0 %v551, 96
    %v555 = vpop.permute.xlu0 %554
    %v557 = vmul.f32 %v552, %v555
    %v558 = vmul.f32 %v540, %v457
    %v559 = vadd.f32 %v557, %v558
    %561 = vrot.lane.b32.xlu0 %v559, 96
    %v562 = vpop.permute.xlu0 %561
    %564 = vst.msk [vmem:[#allocation2 + $0x4] sm:$0x1] %vm155, %v562
    %v565 = vsel %vm45, %v562, 0
    %567 = vmatprep.subr.mxu0 0.0
    %568 = vmatpush1.msra.mxu0 %v17
    %569 = vmatprep.subr.mxu0 0.0
    %570 = vmatpush1.msra.mxu0 %v18
    %571 = vmatprep.subr.mxu0 0.0
    %572 = vmatpush1.msra.mxu0 %v19
    %573 = vmatprep.subr.mxu0 0.0
    %574 = vmatpush1.msra.mxu0 %v20
    %575 = vmatprep.subr.mxu0 0.0
    %576 = vmatpush1.msra.mxu0 0.0
    %577 = vmatprep.subr.mxu0 0.0
    %578 = vmatpush1.msra.mxu0 0.0
    %579 = vmatprep.subr.mxu0 0.0
    %580 = vmatpush1.msra.mxu0 0.0
    %581 = vmatprep.subr.mxu0 0.0
    %582 = vmatpush1.msra.mxu0 0.0
    %583 = vmatprep.subr.mxu0 0.0
    %584 = vmatpush1.msra.mxu0 0.0
    %585 = vmatprep.subr.mxu0 0.0
    %586 = vmatpush1.msra.mxu0 0.0
    %587 = vmatprep.subr.mxu0 0.0
    %588 = vmatpush1.msra.mxu0 0.0
    %589 = vmatprep.subr.mxu0 0.0
    %590 = vmatpush1.msra.mxu0 0.0
    %591 = vmatprep.subr.mxu0 0.0
    %592 = vmatpush1.msra.mxu0 0.0
    %593 = vmatprep.subr.mxu0 0.0
    %594 = vmatpush1.msra.mxu0 0.0
    %595 = vmatprep.subr.mxu0 0.0
    %596 = vmatpush1.msra.mxu0 0.0
    %597 = vmatprep.subr.mxu0 0.0
    %598 = vmatpush1.msra.mxu0 0.0
    %599 = vmatprep.subr.mxu0 0.0
    %600 = vmatpush1.msra.mxu0 0.0
    %601 = vmatprep.subr.mxu0 0.0
    %602 = vmatpush1.msra.mxu0 0.0
    %603 = vmatprep.subr.mxu0 0.0
    %604 = vmatpush1.msra.mxu0 0.0
    %605 = vmatprep.subr.mxu0 0.0
    %606 = vmatpush1.msra.mxu0 0.0
    %607 = vmatprep.subr.mxu0 0.0
    %608 = vmatpush1.msra.mxu0 0.0
    %609 = vmatprep.subr.mxu0 0.0
    %610 = vmatpush1.msra.mxu0 0.0
    %611 = vmatprep.subr.mxu0 0.0
    %612 = vmatpush1.msra.mxu0 0.0
    %613 = vmatprep.subr.mxu0 0.0
    %614 = vmatpush1.msra.mxu0 0.0
    %615 = vmatprep.subr.mxu0 0.0
    %616 = vmatpush1.msra.mxu0 0.0
    %617 = vmatprep.subr.mxu0 0.0
    %618 = vmatpush1.msra.mxu0 0.0
    %619 = vmatprep.subr.mxu0 0.0
    %620 = vmatpush1.msra.mxu0 0.0
    %621 = vmatprep.subr.mxu0 0.0
    %622 = vmatpush1.msra.mxu0 0.0
    %623 = vmatprep.subr.mxu0 0.0
    %624 = vmatpush1.msra.mxu0 0.0
    %625 = vmatprep.subr.mxu0 0.0
    %626 = vmatpush1.msra.mxu0 0.0
    %627 = vmatprep.subr.mxu0 0.0
    %628 = vmatpush1.msra.mxu0 0.0
    %629 = vmatprep.subr.mxu0 0.0
    %630 = vmatpush1.msra.mxu0 0.0
    %631 = vmatprep.mubr.f32.mxu0 0.0
    %632 = vmatmul.mubr.f32.gmra.mrb[0].mxu0 %v565
    %v633 = vpop.f32.mrb[0].mxu0
    %v634 = vadd.f32 %v43, %v633
    %v635 = vpop.f32.mrb[0].mxu0
    %636 = vdwg.mxu0
    %v637 = vxor.u32 %v634, 2147483648
    %v638 = vmul.f32 %v637, 1.442695
    %v639 = vpow.pop %v638
    %v640 = vadd.f32 %v639, 1.0
    %v641 = vrcp.pop %v640
    %v642 = vmul.f32 1.0, %v641
    %644 = vrot.lane.b32.xlu0 %v634, 32
    %v645 = vpop.permute.xlu0 %644
    %v647 = vmul.f32 %v642, %v645
    %649 = vrot.lane.b32.xlu0 %v647, 64
    %v650 = vpop.permute.xlu0 %649
    %v652 = vadd.f32 %v634, %v650
    %v653 = vtanh.pop %v652
    %v654 = vsub.f32 1.0, %v642
    %656 = vrot.lane.b32.xlu0 %v653, 96
    %v657 = vpop.permute.xlu0 %656
    %v659 = vmul.f32 %v654, %v657
    %v660 = vmul.f32 %v642, %v559
    %v661 = vadd.f32 %v659, %v660
    %663 = vrot.lane.b32.xlu0 %v661, 96
    %v664 = vpop.permute.xlu0 %663
    %666 = vst.msk [vmem:[#allocation2 + $0x5] sm:$0x1] %vm155, %v664
    %v667 = vsel %vm45, %v664, 0
    %669 = vmatprep.subr.mxu0 0.0
    %670 = vmatpush1.msra.mxu0 %v17
    %671 = vmatprep.subr.mxu0 0.0
    %672 = vmatpush1.msra.mxu0 %v18
    %673 = vmatprep.subr.mxu0 0.0
    %674 = vmatpush1.msra.mxu0 %v19
    %675 = vmatprep.subr.mxu0 0.0
    %676 = vmatpush1.msra.mxu0 %v20
    %677 = vmatprep.subr.mxu0 0.0
    %678 = vmatpush1.msra.mxu0 0.0
    %679 = vmatprep.subr.mxu0 0.0
    %680 = vmatpush1.msra.mxu0 0.0
    %681 = vmatprep.subr.mxu0 0.0
    %682 = vmatpush1.msra.mxu0 0.0
    %683 = vmatprep.subr.mxu0 0.0
    %684 = vmatpush1.msra.mxu0 0.0
    %685 = vmatprep.subr.mxu0 0.0
    %686 = vmatpush1.msra.mxu0 0.0
    %687 = vmatprep.subr.mxu0 0.0
    %688 = vmatpush1.msra.mxu0 0.0
    %689 = vmatprep.subr.mxu0 0.0
    %690 = vmatpush1.msra.mxu0 0.0
    %691 = vmatprep.subr.mxu0 0.0
    %692 = vmatpush1.msra.mxu0 0.0
    %693 = vmatprep.subr.mxu0 0.0
    %694 = vmatpush1.msra.mxu0 0.0
    %695 = vmatprep.subr.mxu0 0.0
    %696 = vmatpush1.msra.mxu0 0.0
    %697 = vmatprep.subr.mxu0 0.0
    %698 = vmatpush1.msra.mxu0 0.0
    %699 = vmatprep.subr.mxu0 0.0
    %700 = vmatpush1.msra.mxu0 0.0
    %701 = vmatprep.subr.mxu0 0.0
    %702 = vmatpush1.msra.mxu0 0.0
    %703 = vmatprep.subr.mxu0 0.0
    %704 = vmatpush1.msra.mxu0 0.0
    %705 = vmatprep.subr.mxu0 0.0
    %706 = vmatpush1.msra.mxu0 0.0
    %707 = vmatprep.subr.mxu0 0.0
    %708 = vmatpush1.msra.mxu0 0.0
    %709 = vmatprep.subr.mxu0 0.0
    %710 = vmatpush1.msra.mxu0 0.0
    %711 = vmatprep.subr.mxu0 0.0
    %712 = vmatpush1.msra.mxu0 0.0
    %713 = vmatprep.subr.mxu0 0.0
    %714 = vmatpush1.msra.mxu0 0.0
    %715 = vmatprep.subr.mxu0 0.0
    %716 = vmatpush1.msra.mxu0 0.0
    %717 = vmatprep.subr.mxu0 0.0
    %718 = vmatpush1.msra.mxu0 0.0
    %719 = vmatprep.subr.mxu0 0.0
    %720 = vmatpush1.msra.mxu0 0.0
    %721 = vmatprep.subr.mxu0 0.0
    %722 = vmatpush1.msra.mxu0 0.0
    %723 = vmatprep.subr.mxu0 0.0
    %724 = vmatpush1.msra.mxu0 0.0
    %725 = vmatprep.subr.mxu0 0.0
    %726 = vmatpush1.msra.mxu0 0.0
    %727 = vmatprep.subr.mxu0 0.0
    %728 = vmatpush1.msra.mxu0 0.0
    %729 = vmatprep.subr.mxu0 0.0
    %730 = vmatpush1.msra.mxu0 0.0
    %731 = vmatprep.subr.mxu0 0.0
    %732 = vmatpush1.msra.mxu0 0.0
    %733 = vmatprep.mubr.f32.mxu0 0.0
    %734 = vmatmul.mubr.f32.gmra.mrb[0].mxu0 %v667
    %v735 = vpop.f32.mrb[0].mxu0
    %v736 = vadd.f32 %v43, %v735
    %v737 = vpop.f32.mrb[0].mxu0
    %738 = vdwg.mxu0
    %v739 = vxor.u32 %v736, 2147483648
    %v740 = vmul.f32 %v739, 1.442695
    %v741 = vpow.pop %v740
    %v742 = vadd.f32 %v741, 1.0
    %v743 = vrcp.pop %v742
    %v744 = vmul.f32 1.0, %v743
    %746 = vrot.lane.b32.xlu0 %v736, 32
    %v747 = vpop.permute.xlu0 %746
    %v749 = vmul.f32 %v744, %v747
    %751 = vrot.lane.b32.xlu0 %v749, 64
    %v752 = vpop.permute.xlu0 %751
    %v754 = vadd.f32 %v736, %v752
    %v755 = vtanh.pop %v754
    %v756 = vsub.f32 1.0, %v744
    %758 = vrot.lane.b32.xlu0 %v755, 96
    %v759 = vpop.permute.xlu0 %758
    %v761 = vmul.f32 %v756, %v759
    %v762 = vmul.f32 %v744, %v661
    %v763 = vadd.f32 %v761, %v762
    %765 = vrot.lane.b32.xlu0 %v763, 96
    %v766 = vpop.permute.xlu0 %765
    %768 = vst.msk [vmem:[#allocation2 + $0x6] sm:$0x1] %vm155, %v766
    %v769 = vsel %vm45, %v766, 0
    %771 = vmatprep.subr.mxu0 0.0
    %772 = vmatpush1.msra.mxu0 %v17
    %773 = vmatprep.subr.mxu0 0.0
    %774 = vmatpush1.msra.mxu0 %v18
    %775 = vmatprep.subr.mxu0 0.0
    %776 = vmatpush1.msra.mxu0 %v19
    %777 = vmatprep.subr.mxu0 0.0
    %778 = vmatpush1.msra.mxu0 %v20
    %779 = vmatprep.subr.mxu0 0.0
    %780 = vmatpush1.msra.mxu0 0.0
    %781 = vmatprep.subr.mxu0 0.0
    %782 = vmatpush1.msra.mxu0 0.0
    %783 = vmatprep.subr.mxu0 0.0
    %784 = vmatpush1.msra.mxu0 0.0
    %785 = vmatprep.subr.mxu0 0.0
    %786 = vmatpush1.msra.mxu0 0.0
    %787 = vmatprep.subr.mxu0 0.0
    %788 = vmatpush1.msra.mxu0 0.0
    %789 = vmatprep.subr.mxu0 0.0
    %790 = vmatpush1.msra.mxu0 0.0
    %791 = vmatprep.subr.mxu0 0.0
    %792 = vmatpush1.msra.mxu0 0.0
    %793 = vmatprep.subr.mxu0 0.0
    %794 = vmatpush1.msra.mxu0 0.0
    %795 = vmatprep.subr.mxu0 0.0
    %796 = vmatpush1.msra.mxu0 0.0
    %797 = vmatprep.subr.mxu0 0.0
    %798 = vmatpush1.msra.mxu0 0.0
    %799 = vmatprep.subr.mxu0 0.0
    %800 = vmatpush1.msra.mxu0 0.0
    %801 = vmatprep.subr.mxu0 0.0
    %802 = vmatpush1.msra.mxu0 0.0
    %803 = vmatprep.subr.mxu0 0.0
    %804 = vmatpush1.msra.mxu0 0.0
    %805 = vmatprep.subr.mxu0 0.0
    %806 = vmatpush1.msra.mxu0 0.0
    %807 = vmatprep.subr.mxu0 0.0
    %808 = vmatpush1.msra.mxu0 0.0
    %809 = vmatprep.subr.mxu0 0.0
    %810 = vmatpush1.msra.mxu0 0.0
    %811 = vmatprep.subr.mxu0 0.0
    %812 = vmatpush1.msra.mxu0 0.0
    %813 = vmatprep.subr.mxu0 0.0
    %814 = vmatpush1.msra.mxu0 0.0
    %815 = vmatprep.subr.mxu0 0.0
    %816 = vmatpush1.msra.mxu0 0.0
    %817 = vmatprep.subr.mxu0 0.0
    %818 = vmatpush1.msra.mxu0 0.0
    %819 = vmatprep.subr.mxu0 0.0
    %820 = vmatpush1.msra.mxu0 0.0
    %821 = vmatprep.subr.mxu0 0.0
    %822 = vmatpush1.msra.mxu0 0.0
    %823 = vmatprep.subr.mxu0 0.0
    %824 = vmatpush1.msra.mxu0 0.0
    %825 = vmatprep.subr.mxu0 0.0
    %826 = vmatpush1.msra.mxu0 0.0
    %827 = vmatprep.subr.mxu0 0.0
    %828 = vmatpush1.msra.mxu0 0.0
    %829 = vmatprep.subr.mxu0 0.0
    %830 = vmatpush1.msra.mxu0 0.0
    %831 = vmatprep.subr.mxu0 0.0
    %832 = vmatpush1.msra.mxu0 0.0
    %833 = vmatprep.subr.mxu0 0.0
    %834 = vmatpush1.msra.mxu0 0.0
    %835 = vmatprep.mubr.f32.mxu0 0.0
    %836 = vmatmul.mubr.f32.gmra.mrb[0].mxu0 %v769
    %v837 = vpop.f32.mrb[0].mxu0
    %v838 = vadd.f32 %v43, %v837
    %v839 = vpop.f32.mrb[0].mxu0
    %840 = vdwg.mxu0
    %v841 = vxor.u32 %v838, 2147483648
    %v842 = vmul.f32 %v841, 1.442695
    %v843 = vpow.pop %v842
    %v844 = vadd.f32 %v843, 1.0
    %v845 = vrcp.pop %v844
    %v846 = vmul.f32 1.0, %v845
    %848 = vrot.lane.b32.xlu0 %v838, 32
    %v849 = vpop.permute.xlu0 %848
    %v851 = vmul.f32 %v846, %v849
    %853 = vrot.lane.b32.xlu0 %v851, 64
    %v854 = vpop.permute.xlu0 %853
    %v856 = vadd.f32 %v838, %v854
    %v857 = vtanh.pop %v856
    %v858 = vsub.f32 1.0, %v846
    %860 = vrot.lane.b32.xlu0 %v857, 96
    %v861 = vpop.permute.xlu0 %860
    %v863 = vmul.f32 %v858, %v861
    %v864 = vmul.f32 %v846, %v763
    %v865 = vadd.f32 %v863, %v864
    %867 = vrot.lane.b32.xlu0 %v865, 96
    %v868 = vpop.permute.xlu0 %867
    %870 = vst.msk [vmem:[#allocation2 + $0x7] sm:$0x1] %vm155, %v868
    %v871 = vld [vmem:[#allocation2] sm:$0xff]
    %v873 = vlaneseq
    %v874 = vshrl.u32 %v873, 7
    %v875 = vsub.s32 0, %v874
    %v876 = vrot.slane %v28, %v875
    %877 = vrot.lane.b32.xlu0 %v876, 96
    %v878 = vpop.permute.xlu0 %877
    %v881 = vsel %vm45, %v871, 0
    %883 = vmatprep.subr.mxu0 0.0
    %884 = vmatpush1.msra.mxu0 %v22
    %885 = vmatprep.subr.mxu0 0.0
    %886 = vmatpush1.msra.mxu0 %v23
    %887 = vmatprep.subr.mxu0 0.0
    %888 = vmatpush1.msra.mxu0 %v24
    %889 = vmatprep.subr.mxu0 0.0
    %890 = vmatpush1.msra.mxu0 %v25
    %891 = vmatprep.subr.mxu0 0.0
    %892 = vmatpush1.msra.mxu0 0.0
    %893 = vmatprep.subr.mxu0 0.0
    %894 = vmatpush1.msra.mxu0 0.0
    %895 = vmatprep.subr.mxu0 0.0
    %896 = vmatpush1.msra.mxu0 0.0
    %897 = vmatprep.subr.mxu0 0.0
    %898 = vmatpush1.msra.mxu0 0.0
    %899 = vmatprep.subr.mxu0 0.0
    %900 = vmatpush1.msra.mxu0 0.0
    %901 = vmatprep.subr.mxu0 0.0
    %902 = vmatpush1.msra.mxu0 0.0
    %903 = vmatprep.subr.mxu0 0.0
    %904 = vmatpush1.msra.mxu0 0.0
    %905 = vmatprep.subr.mxu0 0.0
    %906 = vmatpush1.msra.mxu0 0.0
    %907 = vmatprep.subr.mxu0 0.0
    %908 = vmatpush1.msra.mxu0 0.0
    %909 = vmatprep.subr.mxu0 0.0
    %910 = vmatpush1.msra.mxu0 0.0
    %911 = vmatprep.subr.mxu0 0.0
    %912 = vmatpush1.msra.mxu0 0.0
    %913 = vmatprep.subr.mxu0 0.0
    %914 = vmatpush1.msra.mxu0 0.0
    %915 = vmatprep.subr.mxu0 0.0
    %916 = vmatpush1.msra.mxu0 0.0
    %917 = vmatprep.subr.mxu0 0.0
    %918 = vmatpush1.msra.mxu0 0.0
    %919 = vmatprep.subr.mxu0 0.0
    %920 = vmatpush1.msra.mxu0 0.0
    %921 = vmatprep.subr.mxu0 0.0
    %922 = vmatpush1.msra.mxu0 0.0
    %923 = vmatprep.subr.mxu0 0.0
    %924 = vmatpush1.msra.mxu0 0.0
    %925 = vmatprep.subr.mxu0 0.0
    %926 = vmatpush1.msra.mxu0 0.0
    %927 = vmatprep.subr.mxu0 0.0
    %928 = vmatpush1.msra.mxu0 0.0
    %929 = vmatprep.subr.mxu0 0.0
    %930 = vmatpush1.msra.mxu0 0.0
    %931 = vmatprep.subr.mxu0 0.0
    %932 = vmatpush1.msra.mxu0 0.0
    %933 = vmatprep.subr.mxu0 0.0
    %934 = vmatpush1.msra.mxu0 0.0
    %935 = vmatprep.subr.mxu0 0.0
    %936 = vmatpush1.msra.mxu0 0.0
    %937 = vmatprep.subr.mxu0 0.0
    %938 = vmatpush1.msra.mxu0 0.0
    %939 = vmatprep.subr.mxu0 0.0
    %940 = vmatpush1.msra.mxu0 0.0
    %941 = vmatprep.subr.mxu0 0.0
    %942 = vmatpush1.msra.mxu0 0.0
    %943 = vmatprep.subr.mxu0 0.0
    %944 = vmatpush1.msra.mxu0 0.0
    %945 = vmatprep.subr.mxu0 0.0
    %946 = vmatpush1.msra.mxu0 0.0
    %947 = vmatprep.mubr.f32.mxu0 0.0
    %948 = vmatmul.mubr.f32.gmra.mrb[0].mxu0 %v881
    %v949 = vpop.f32.mrb[0].mxu0
    %v950 = vadd.f32 %v878, %v949
    %v951 = vpop.f32.mrb[0].mxu0
    %952 = vdwg.mxu0
    %vm953 = vcmask 130048
    %v954 = vsel %vm953, %v950, -inf
    %955 = vmax.xlane.f32.xlu0 %v954
    %v956 = vpop.xlane.xlu0 %955
    %v957 = vsub.f32 %v950, %v956
    %v958 = vmul.f32 %v957, 1.442695
    %v959 = vpow.pop %v958
    %v960 = vsel %vm953, %v959, 0.0
    %961 = vadd.xlane.f32.xlu0 %v960
    %v962 = vpop.xlane.xlu0 %961
    %v963 = vrcp.pop %v962
    %v964 = vmul.f32 %v959, %v963
    %965 = vst.msk [vmem:[#allocation3] sm:$0xff] %vm953, %v964
    // Predicated region
    $region10: #{neural_ode_decoder_forward.1} parent=1 // pred_check
      _
    $region11: #{neural_ode_decoder_forward.1} parent=1 // pred_check_branch
      %967 = sbr.rel (0) target = $region13
    $region12: #{neural_ode_decoder_forward.1} parent=1 // pred_region
      %s969 = ssub.s32 128, 128
      %970 = vsyncadd [#allocation4], %s969
      %s972 = sshll.u32 [#allocation3], 4
      %s973 = int_to_ptr.vmem [resolvable:$true] %s972
      %975 = dma.vmem_to_hbm [thread:$0]  %s973, 128, %s2, [#allocation4]
    $region13: #{neural_ode_decoder_forward.1} parent=1 // pred_fallthru
      _
    // Predicated region
    $region14: #{neural_ode_decoder_forward.1} parent=1 // pred_check
      _
    $region15: #{neural_ode_decoder_forward.1} parent=1 // pred_check_branch
      %977 = sbr.rel (0) target = $region17
    $region16: #{neural_ode_decoder_forward.1} parent=1 // pred_region
      %978 = dma.done [#allocation4], 128
    $region17: #{neural_ode_decoder_forward.1} parent=1 // pred_fallthru
      _
    %979 = vsyncpa [#allocation4], 1

</llo_original>
